<compile_context>
chip_gen: v7x
topology: tpu7x:2x2x1
jax: 0.10.0
libtpu: 0.0.40
codegen_flags: <defaults>
</compile_context>

<pallas_src>
import functools
import math

import jax
import jax.numpy as jnp
from jax.experimental import pallas as pl
from jax.experimental.pallas import tpu as pltpu


# ---------------------------------------------------------------------------
# Kernels
# ---------------------------------------------------------------------------
def _pe_add_kernel(x_ref, pe_ref, o_ref):
    # x_ref: (tile_S, B, D), pe_ref: (tile_S, 1, D) -> broadcast add over batch.
    o_ref[...] = (x_ref[...] + pe_ref[...]).astype(o_ref.dtype)


def _pe_add_dropout_kernel(x_ref, pe_ref, bits_ref, o_ref, *, threshold, scale):
    # Training path: add positional encoding, then inverted dropout.
    # keep iff bits >= threshold  (threshold = round(p * 2^32))  -> P(keep) = 1 - p
    y = x_ref[...] + pe_ref[...]
    keep = bits_ref[...] >= jnp.uint32(threshold)
    scaled = y * jnp.asarray(scale, dtype=y.dtype)
    o_ref[...] = jnp.where(keep, scaled, jnp.zeros_like(scaled)).astype(o_ref.dtype)


# ---------------------------------------------------------------------------
# Wrapper module
# ---------------------------------------------------------------------------
class PositionalEncoding:
    def __init__(self, d_model, dropout=0.1, max_len=500):
        assert d_model % 2 == 0, "d_model must be even (same as PyTorch original)"
        self.p = float(dropout)
        self.d_model = d_model
        self.max_len = max_len

        # Deterministic buffer construction (same math as the PyTorch __init__).
        position = jnp.arange(0, max_len, dtype=jnp.float32)[:, None]            # (L, 1)
        div_term = jnp.exp(
            jnp.arange(0, d_model, 2, dtype=jnp.float32)
            * (-math.log(10000.0) / d_model)
        )                                                                          # (D/2,)
        pe = jnp.zeros((max_len, d_model), dtype=jnp.float32)
        pe = pe.at[:, 0::2].set(jnp.sin(position * div_term))
        pe = pe.at[:, 1::2].set(jnp.cos(position * div_term))
        # Same shape as the PyTorch buffer: (max_len, 1, d_model)
        self.pe = pe.reshape(max_len, 1, d_model)
        self._pe_cache = {}

    # ------------------------------------------------------------------ utils
    def _pe_for_dtype(self, dtype):
        dtype = jnp.dtype(dtype)
        cached = self._pe_cache.get(dtype)
        if cached is None:
            cached = self.pe.astype(dtype)
            self._pe_cache[dtype] = cached
        return cached

    @staticmethod
    def _choose_tile_s(S, B, D, itemsize):
        # ~1 MiB per x block: with x/bits/out double-buffered this stays well
        # under the scoped-VMEM default on v5e (16 MiB) and v6e/v7x (32 MiB).
        target_bytes = 1 << 20
        rows = max(1, target_bytes // max(1, B * D * itemsize))
        tile = min(S, rows)
        if tile > 8:
            tile -= tile % 8   # sublane-friendly
        return max(1, tile)

    # ---------------------------------------------------------------- forward
    def __call__(self, x, *, training=False, rng_key=None):
        S, B, D = x.shape
        assert D == self.d_model and S <= self.max_len

        pe = self._pe_for_dtype(x.dtype)                     # (max_len, 1, D)
        itemsize = jnp.dtype(x.dtype).itemsize
        tile_s = self._choose_tile_s(S, B, D, itemsize)
        grid = (pl.cdiv(S, tile_s),)

        x_spec = pl.BlockSpec((tile_s, B, D), lambda i: (i, 0, 0))
        pe_spec = pl.BlockSpec((tile_s, 1, D), lambda i: (i, 0, 0))
        out_spec = pl.BlockSpec((tile_s, B, D), lambda i: (i, 0, 0))

        # TPU compiler params (megacore sharding + headroom on v5e's 16 MiB
        # default scoped VMEM). Skipped when not lowering for TPU (interpret/CPU).
        if jax.default_backend() == "tpu":
            cparams = pltpu.CompilerParams(
                dimension_semantics=("parallel",),
                vmem_limit_bytes=32 * 1024 * 1024,
            )
        else:
            cparams = None

        if (not training) or self.p == 0.0:
            return pl.pallas_call(
                _pe_add_kernel,
                grid=grid,
                in_specs=[x_spec, pe_spec],
                out_specs=out_spec,
                out_shape=jax.ShapeDtypeStruct(x.shape, x.dtype),
                compiler_params=cparams,
            )(x, pe)

        if rng_key is None:
            rng_key = jax.random.PRNGKey(0)
        bits = jax.random.bits(rng_key, x.shape, dtype=jnp.uint32)
        threshold = min(int(round(self.p * (1 << 32))), (1 << 32) - 1)
        scale = 1.0 / (1.0 - self.p)

        kernel = functools.partial(
            _pe_add_dropout_kernel, threshold=threshold, scale=scale
        )
        bits_spec = pl.BlockSpec((tile_s, B, D), lambda i: (i, 0, 0))
        return pl.pallas_call(
            kernel,
            grid=grid,
            in_specs=[x_spec, pe_spec, bits_spec],
            out_specs=out_spec,
            out_shape=jax.ShapeDtypeStruct(x.shape, x.dtype),
            compiler_params=cparams,
        )(x, pe, bits)


# ---------------------------------------------------------------------------
# Demo / smoke test
# ---------------------------------------------------------------------------
if __name__ == "__main__":
    seq, batch, d_model = 8, 2, 32
    key = jax.random.PRNGKey(0)
    x = jax.random.normal(key, (seq, batch, d_model), dtype=jnp.float32)

    module = PositionalEncoding(d_model=d_model, dropout=0.1, max_len=500)

    # Pure-JAX reference of the PE add (broadcast over batch).
    ref = x + module.pe[:seq]                                  # (S, B, D)

    # Eval-mode forward (dropout is identity).
    out_eval = jax.block_until_ready(module(x, training=False))
    assert out_eval.shape == x.shape and out_eval.dtype == x.dtype
    assert jnp.allclose(out_eval, ref, atol=1e-5, rtol=1e-5), "eval-mode mismatch"

    # Training-mode forward (inverted dropout) — check exactly against the same
    # random bits / integer threshold the wrapper uses.
    drop_key = jax.random.PRNGKey(123)
    out_train = jax.block_until_ready(module(x, training=True, rng_key=drop_key))
    assert out_train.shape == x.shape and out_train.dtype == x.dtype

    bits = jax.random.bits(drop_key, x.shape, dtype=jnp.uint32)
    threshold = min(int(round(module.p * (1 << 32))), (1 << 32) - 1)
    keep = bits >= jnp.uint32(threshold)
    expected = jnp.where(keep, ref * jnp.float32(1.0 / (1.0 - module.p)), 0.0)
    assert jnp.allclose(out_train, expected, atol=1e-5, rtol=1e-5), "train-mode mismatch"

    print("KERNEL_OK")
</pallas_src>

<mosaic_0001>
module attributes {stable_mosaic.version = 11 : i64} {
  func.func @_pe_add_kernel(%arg0: i32, %arg1: memref<8x2x32xf32, #tpu.memory_space<vmem>>, %arg2: memref<8x1x32xf32, #tpu.memory_space<vmem>>, %arg3: memref<8x2x32xf32, #tpu.memory_space<vmem>>) attributes {dimension_semantics = [#tpu.dimension_semantics<arbitrary>], iteration_bounds = array<i64: 1>, scalar_prefetch = 0 : i64, scratch_operands = 0 : i64, tpu.core_type = #tpu.core_type<tc>, window_params = [{transform_indices = @transform_0, window_bounds = array<i64: 8, 2, 32>}, {transform_indices = @transform_1, window_bounds = array<i64: 8, 1, 32>}, {transform_indices = @transform_2, window_bounds = array<i64: 8, 2, 32>}]} {
    %c0 = arith.constant 0 : index
    %c0_0 = arith.constant 0 : index
    %c0_1 = arith.constant 0 : index
    %0 = vector.load %arg1[%c0, %c0_0, %c0_1] : memref<8x2x32xf32, #tpu.memory_space<vmem>>, vector<8x2x32xf32>
    %c0_2 = arith.constant 0 : index
    %c0_3 = arith.constant 0 : index
    %c0_4 = arith.constant 0 : index
    %1 = vector.load %arg2[%c0_2, %c0_3, %c0_4] : memref<8x1x32xf32, #tpu.memory_space<vmem>>, vector<8x1x32xf32>
    %2 = vector.broadcast %1 : vector<8x1x32xf32> to vector<8x2x32xf32>
    %3 = arith.addf %0, %2 : vector<8x2x32xf32>
    %c0_5 = arith.constant 0 : index
    %c0_6 = arith.constant 0 : index
    %c0_7 = arith.constant 0 : index
    %4 = vector.load %arg3[%c0_5, %c0_6, %c0_7] : memref<8x2x32xf32, #tpu.memory_space<vmem>>, vector<8x2x32xf32>
    tpu.vector_store %arg3[%c0_5, %c0_6, %c0_7], %3 {strides = array<i32>} : memref<8x2x32xf32, #tpu.memory_space<vmem>>, vector<8x2x32xf32>,
    return
  }
  func.func @transform_0(%arg0: i32) -> (i32, i32, i32) {
    %c0_i32 = arith.constant 0 : i32
    %c0_i32_0 = arith.constant 0 : i32
    %c0_i32_1 = arith.constant 0 : i32
    return %arg0, %c0_i32, %c0_i32_0 : i32, i32, i32
  }
  func.func @transform_1(%arg0: i32) -> (i32, i32, i32) {
    %c0_i32 = arith.constant 0 : i32
    %c0_i32_0 = arith.constant 0 : i32
    %c0_i32_1 = arith.constant 0 : i32
    return %arg0, %c0_i32, %c0_i32_0 : i32, i32, i32
  }
  func.func @transform_2(%arg0: i32) -> (i32, i32, i32) {
    %c0_i32 = arith.constant 0 : i32
    %c0_i32_0 = arith.constant 0 : i32
    %c0_i32_1 = arith.constant 0 : i32
    return %arg0, %c0_i32, %c0_i32_0 : i32, i32, i32
  }
}

</mosaic_0001>

<llo_original>
// kernel: tpu_custom_call.1
$region0: #{tpu_custom_call.1}
  #allocation0 [shape = 'u32[]', space=smem, size = 0x4, offset = 0x4, fixed_abs, tag = 'smem constant byte address 0x4 - core index']
  #allocation1 [shape = 'u32[144,128]{1,0:T(1,128)}', space=vmem, size = 0x12000, scoped, tag = 'internal scratch']
  %s0 = inlined_call_operand.vmem [shape: f32[8,2,32], index: 0, kind: input, shape index: {}]
  %s1 = inlined_call_operand.vmem [shape: f32[500,1,32], index: 1, kind: input, shape index: {}]
  %s2 = inlined_call_operand.hbm [shape: f32[8,2,32], index: 2, kind: output, shape index: {}]
  %s3 = sld [smem:[#allocation0]]
  $region18: #{tpu_custom_call.1} parent=0
    _
  %s5 = ssub.s32 1, %s3
  %s6 = scalar_select 0, %s5, %s3
  $region1: #{tpu_custom_call.1} parent=0
    #allocation2 [shape = 'u8[8192]{0}', space=vmem, size = 0x2000, scoped, tag = 'output window, operand 0, single buffered']
    #allocation3 [shape = 's32[1]{0}', space=sflag, size = 0x4, scoped, tag = 'scoped memory for tpu_custom_call.1']
    %7 = vsyncpa [#allocation3], 0
    // Predicated region
    $region2: #{tpu_custom_call.1} parent=1 // pred_check
      _
    $region3: #{tpu_custom_call.1} parent=1 // pred_check_branch
      %9 = sbr.rel (0) target = $region5
    $region4: #{tpu_custom_call.1} parent=1 // pred_region
      _
    $region5: #{tpu_custom_call.1} parent=1 // pred_fallthru
      _
    // Predicated region
    $region6: #{tpu_custom_call.1} parent=1 // pred_check
      _
    $region7: #{tpu_custom_call.1} parent=1 // pred_check_branch
      %11 = sbr.rel (0) target = $region9
    $region8: #{tpu_custom_call.1} parent=1 // pred_region
      _
    $region9: #{tpu_custom_call.1} parent=1 // pred_fallthru
      _
    %v12 = vld [vmem:[%s0] sm:$0x3]
    %v13 = vld [vmem:[%s0 + $0x2] sm:$0x3]
    %v14 = vld [vmem:[%s0 + $0x4] sm:$0x3]
    %v15 = vld [vmem:[%s0 + $0x6] sm:$0x3]
    %v16 = vld [vmem:[%s0 + $0x8] sm:$0x3]
    %v17 = vld [vmem:[%s0 + $0xa] sm:$0x3]
    %v18 = vld [vmem:[%s0 + $0xc] sm:$0x3]
    %v19 = vld [vmem:[%s0 + $0xe] sm:$0x3]
    %v20 = vld [vmem:[%s1] sm:$0x1]
    %v21 = vld [vmem:[%s1 + $0x1] sm:$0x1]
    %v22 = vld [vmem:[%s1 + $0x2] sm:$0x1]
    %v23 = vld [vmem:[%s1 + $0x3] sm:$0x1]
    %v24 = vld [vmem:[%s1 + $0x4] sm:$0x1]
    %v25 = vld [vmem:[%s1 + $0x5] sm:$0x1]
    %v26 = vld [vmem:[%s1 + $0x6] sm:$0x1]
    %v27 = vld [vmem:[%s1 + $0x7] sm:$0x1]
    %v36 = vlaneseq
    %v37 = vshrl.u32 %v36, 7
    %v38 = vsub.s32 0, %v37
    %v39 = vrot.slane %v20, %v38
    %v40 = vlaneseq
    %v41 = vshrl.u32 %v40, 7
    %v42 = vsub.s32 0, %v41
    %v43 = vrot.slane %v21, %v42
    %v44 = vlaneseq
    %v45 = vshrl.u32 %v44, 7
    %v46 = vsub.s32 0, %v45
    %v47 = vrot.slane %v22, %v46
    %v48 = vlaneseq
    %v49 = vshrl.u32 %v48, 7
    %v50 = vsub.s32 0, %v49
    %v51 = vrot.slane %v23, %v50
    %v52 = vlaneseq
    %v53 = vshrl.u32 %v52, 7
    %v54 = vsub.s32 0, %v53
    %v55 = vrot.slane %v24, %v54
    %v56 = vlaneseq
    %v57 = vshrl.u32 %v56, 7
    %v58 = vsub.s32 0, %v57
    %v59 = vrot.slane %v25, %v58
    %v60 = vlaneseq
    %v61 = vshrl.u32 %v60, 7
    %v62 = vsub.s32 0, %v61
    %v63 = vrot.slane %v26, %v62
    %v64 = vlaneseq
    %v65 = vshrl.u32 %v64, 7
    %v66 = vsub.s32 0, %v65
    %v67 = vrot.slane %v27, %v66
    %v76 = vadd.f32 %v12, %v39
    %v77 = vadd.f32 %v13, %v43
    %v78 = vadd.f32 %v14, %v47
    %v79 = vadd.f32 %v15, %v51
    %v80 = vadd.f32 %v16, %v55
    %v81 = vadd.f32 %v17, %v59
    %v82 = vadd.f32 %v18, %v63
    %v83 = vadd.f32 %v19, %v67
    %vm84 = vcmask 254976
    %85 = vst.msk [vmem:[#allocation2] sm:$0x3] %vm84, %v76
    %86 = vst.msk [vmem:[#allocation2 + $0x2] sm:$0x3] %vm84, %v77
    %87 = vst.msk [vmem:[#allocation2 + $0x4] sm:$0x3] %vm84, %v78
    %88 = vst.msk [vmem:[#allocation2 + $0x6] sm:$0x3] %vm84, %v79
    %89 = vst.msk [vmem:[#allocation2 + $0x8] sm:$0x3] %vm84, %v80
    %90 = vst.msk [vmem:[#allocation2 + $0xa] sm:$0x3] %vm84, %v81
    %91 = vst.msk [vmem:[#allocation2 + $0xc] sm:$0x3] %vm84, %v82
    %92 = vst.msk [vmem:[#allocation2 + $0xe] sm:$0x3] %vm84, %v83
    // Predicated region
    $region10: #{tpu_custom_call.1} parent=1 // pred_check
      _
    $region11: #{tpu_custom_call.1} parent=1 // pred_check_branch
      %94 = sbr.rel (0) target = $region13
    $region12: #{tpu_custom_call.1} parent=1 // pred_region
      %s96 = ssub.s32 256, 256
      %97 = vsyncadd [#allocation3], %s96
      %s98 = sshll.u32 [#allocation2], 4
      %s99 = int_to_ptr.vmem [resolvable:$true] %s98
      %104 = dma.vmem_to_hbm [thread:$0]  %s99, 256, %s2, [#allocation3], 32, 32, 2
    $region13: #{tpu_custom_call.1} parent=1 // pred_fallthru
      _
    // Predicated region
    $region14: #{tpu_custom_call.1} parent=1 // pred_check
      _
    $region15: #{tpu_custom_call.1} parent=1 // pred_check_branch
      %106 = sbr.rel (0) target = $region17
    $region16: #{tpu_custom_call.1} parent=1 // pred_region
      %107 = dma.done [#allocation3], 256
    $region17: #{tpu_custom_call.1} parent=1 // pred_fallthru
      _
    %108 = vsyncpa [#allocation3], 1

</llo_original>
